<compile_context>
chip_gen: v5e
topology: v5e:2x2
jax: 0.10.0
libtpu: 0.0.40
codegen_flags: <defaults>
</compile_context>

<pallas_src>
import functools

import jax
import jax.numpy as jnp
from jax import lax
from jax.experimental import pallas as pl
from jax.experimental.pallas import tpu as pltpu


_X_TILE_BYTES = 8 << 20          # target bytes per x block (pooled path)
_K_SLAB_BYTES = 6 << 20          # target bytes per K slab (x chunk + w chunk, no-pool)
_VMEM_LIMIT = 48 * 1024 * 1024   # explicit scoped-VMEM cap (safe on v5e/v6e/v7x)


def _round_up(x, m):
    return (x + m - 1) // m * m


def _batch_tile(n):
    # Larger TN amortizes init/finalize and fills the MXU for big batches while
    # keeping >=2 grid steps on the parallel N axis (megacore) whenever N allows.
    if n >= 256:
        return 64
    if n >= 64:
        return 32
    return 8


# ----------------------------------------------------------------------------
# with_avg_pool=True: spatial mean (lane reduce) streamed over HW, then one
# matmul against the small resident (C, OUT) weight at finalize.
# ----------------------------------------------------------------------------
def _pooled_kernel(x_ref, w_ref, b_ref, o_ref, acc_ref, *, hw, thw):
    # x_ref: (TN, C, THW)  w_ref: (C, OUT)  b_ref: (1, OUT)
    # o_ref: (TN, OUT)     acc_ref: VMEM (TN, C) f32 spatial-sum accumulator
    k = pl.program_id(1)

    @pl.when(k == 0)
    def _init():
        acc_ref[...] = jnp.zeros_like(acc_ref)

    xb = x_ref[...]
    if hw % thw != 0:
        # Ragged last HW block: lanes past the true extent are undefined; zero them.
        lane = lax.broadcasted_iota(jnp.int32, xb.shape, 2)
        xb = jnp.where(lane < (hw - k * thw), xb, 0)
    acc_ref[...] += jnp.sum(xb, axis=-1, dtype=jnp.float32)

    @pl.when(k == pl.num_programs(1) - 1)
    def _finalize():
        pooled = acc_ref[...] * (1.0 / hw)                    # mean = sum / HW
        out = jnp.dot(pooled.astype(w_ref.dtype), w_ref[...],
                      preferred_element_type=jnp.float32)     # MXU (TN, OUT)
        o_ref[...] = (out + b_ref[...]).astype(o_ref.dtype)


def _linear_neck_pooled(x_nchw, weight_oc, bias_o):
    N, C, H, W = x_nchw.shape
    OUT, C_in = weight_oc.shape
    assert C_in == C
    HW = H * W
    ex = jnp.dtype(x_nchw.dtype).itemsize

    # ---- tiles -------------------------------------------------------------
    TN = _batch_tile(N)
    while TN > 8 and TN * C * ex * min(HW, 128) > _X_TILE_BYTES:
        TN //= 2                                   # guard: minimal 128-lane slab must fit
    per_lane = TN * C * ex
    if HW <= 128 or HW * per_lane <= _X_TILE_BYTES:
        THW = HW                                   # whole spatial extent in one block
    else:
        THW = max(128, min((HW // 128) * 128,
                           (_X_TILE_BYTES // per_lane) // 128 * 128))
    n_hw = pl.cdiv(HW, THW)
    Np = _round_up(N, TN)

    # ---- operands (x stays in native NCHW order; the reshape is free) -------
    x_in = x_nchw.reshape(N, C, HW)
    if Np != N:                                    # only the batch axis is ever padded
        x_in = jnp.pad(x_in, ((0, Np - N), (0, 0), (0, 0)))
    w_t = weight_oc.T                              # (C, OUT): small; caller dtype kept
    b2 = bias_o.reshape(1, OUT)

    ew = jnp.dtype(w_t.dtype).itemsize
    cost = pl.CostEstimate(
        flops=2 * N * C * OUT + N * C * HW,
        transcendentals=0,
        bytes_accessed=int(x_in.size) * ex + int(w_t.size) * ew
        + int(b2.size) * jnp.dtype(b2.dtype).itemsize + Np * OUT * ex)

    out = pl.pallas_call(
        functools.partial(_pooled_kernel, hw=HW, thw=THW),
        out_shape=jax.ShapeDtypeStruct((Np, OUT), x_nchw.dtype),
        grid_spec=pltpu.PrefetchScalarGridSpec(
            num_scalar_prefetch=0,
            grid=(Np // TN, n_hw),
            in_specs=[
                pl.BlockSpec((TN, C, THW), lambda i, k: (i, 0, k)),
                pl.BlockSpec((C, OUT), lambda i, k: (0, 0)),    # resident weight
                pl.BlockSpec((1, OUT), lambda i, k: (0, 0)),    # resident bias
            ],
            out_specs=pl.BlockSpec((TN, OUT), lambda i, k: (i, 0)),
            scratch_shapes=[pltpu.VMEM((TN, C), jnp.float32)],
        ),
        compiler_params=pltpu.CompilerParams(
            dimension_semantics=("parallel", "arbitrary"),
            vmem_limit_bytes=_VMEM_LIMIT),
        cost_estimate=cost,
    )(x_in, w_t, b2)
    return out[:N] if Np != N else out


# ----------------------------------------------------------------------------
# with_avg_pool=False: K-tiled fc over the flattened C*H*W features.  Weight is
# streamed in (TK, OUT) chunks (never fully VMEM-resident).
# ----------------------------------------------------------------------------
def _flat_kernel(x_ref, w_ref, b_ref, o_ref, acc_ref, *, cf, tk):
    # x_ref: (TN, TK)  w_ref: (TK, OUT)  b_ref: (1, OUT)
    # o_ref: (TN, OUT) acc_ref: VMEM (TN, OUT) f32 matmul accumulator
    k = pl.program_id(1)

    @pl.when(k == 0)
    def _init():
        acc_ref[...] = jnp.zeros_like(acc_ref)

    xb = x_ref[...]
    wb = w_ref[...]
    if cf % tk != 0:
        # Ragged last K block: zero undefined lanes/rows on BOTH operands so
        # garbage (possibly NaN) cannot pollute the accumulation.
        valid = cf - k * tk
        xb = jnp.where(lax.broadcasted_iota(jnp.int32, xb.shape, 1) < valid, xb, 0)
        wb = jnp.where(lax.broadcasted_iota(jnp.int32, wb.shape, 0) < valid, wb, 0)
    acc_ref[...] += jnp.dot(xb, wb, preferred_element_type=jnp.float32)

    @pl.when(k == pl.num_programs(1) - 1)
    def _finalize():
        o_ref[...] = (acc_ref[...] + b_ref[...]).astype(o_ref.dtype)


def _linear_neck_flat(x_nchw, weight_oc, bias_o):
    N, C, H, W = x_nchw.shape
    OUT, CF = weight_oc.shape
    assert CF == C * H * W
    ex = jnp.dtype(x_nchw.dtype).itemsize
    ew = jnp.dtype(weight_oc.dtype).itemsize

    # ---- tiles -------------------------------------------------------------
    TN = _batch_tile(N)
    per_k = TN * ex + OUT * ew                     # bytes per unit-K (x slab + w slab)
    if CF <= 128 or CF * per_k <= _K_SLAB_BYTES:
        TK = CF                                    # single K step
    else:
        TK = max(128, min((CF // 128) * 128,
                          (_K_SLAB_BYTES // per_k) // 128 * 128))
    n_k = pl.cdiv(CF, TK)
    Np = _round_up(N, TN)

    # ---- operands ------------------------------------------------------------
    x_in = x_nchw.reshape(N, CF)                   # free, contiguous
    if Np != N:
        x_in = jnp.pad(x_in, ((0, Np - N), (0, 0)))
    # TODO(synk): for very large fc weights, a caller-side pre-transposed
    # (CF, OUT) weight would avoid this one-time transpose copy.
    w_t = weight_oc.T                              # (CF, OUT), streamed as (TK, OUT)
    b2 = bias_o.reshape(1, OUT)

    cost = pl.CostEstimate(
        flops=2 * N * CF * OUT,
        transcendentals=0,
        bytes_accessed=int(x_in.size) * ex + int(w_t.size) * ew
        + int(b2.size) * jnp.dtype(b2.dtype).itemsize + Np * OUT * ex)

    out = pl.pallas_call(
        functools.partial(_flat_kernel, cf=CF, tk=TK),
        out_shape=jax.ShapeDtypeStruct((Np, OUT), x_nchw.dtype),
        grid_spec=pltpu.PrefetchScalarGridSpec(
            num_scalar_prefetch=0,
            grid=(Np // TN, n_k),
            in_specs=[
                pl.BlockSpec((TN, TK), lambda i, k: (i, k)),
                pl.BlockSpec((TK, OUT), lambda i, k: (k, 0)),   # streamed weight chunk
                pl.BlockSpec((1, OUT), lambda i, k: (0, 0)),    # resident bias
            ],
            out_specs=pl.BlockSpec((TN, OUT), lambda i, k: (i, 0)),
            scratch_shapes=[pltpu.VMEM((TN, OUT), jnp.float32)],
        ),
        compiler_params=pltpu.CompilerParams(
            dimension_semantics=("parallel", "arbitrary"),
            vmem_limit_bytes=_VMEM_LIMIT),
        cost_estimate=cost,
    )(x_in, w_t, b2)
    return out[:N] if Np != N else out


def linear_neck(x_nchw, weight_oc, bias_o, with_avg_pool=True):
    """JAX/Pallas equivalent of LinearNeck.forward([x]).

    x_nchw   : (N, C, H, W)
    weight_oc: (OUT, C_in) PyTorch nn.Linear weight layout
               (C_in == C if with_avg_pool else C*H*W)
    bias_o   : (OUT,)
    returns  : list with a single (N, OUT) array
    """
    if with_avg_pool:
        return [_linear_neck_pooled(x_nchw, weight_oc, bias_o)]
    return [_linear_neck_flat(x_nchw, weight_oc, bias_o)]


if __name__ == "__main__":
    # Small shapes consistent with the module: batch=2, in_channels=4,
    # spatial=16x16, out_channels=32.
    N, C, H, W, OUT = 2, 4, 16, 16, 32
    key = jax.random.PRNGKey(0)
    kx, kw, kw2 = jax.random.split(key, 3)

    x = jax.random.normal(kx, (N, C, H, W), dtype=jnp.float32)
    # init_weights(init_linear='normal'): weight ~ N(0, 0.01), bias = 0
    weight = 0.01 * jax.random.normal(kw, (OUT, C), dtype=jnp.float32)
    bias = jnp.zeros((OUT,), dtype=jnp.float32)

    out = linear_neck(x, weight, bias, with_avg_pool=True)
    jax.block_until_ready(out[0])
    ref = jnp.mean(x, axis=(2, 3)) @ weight.T + bias
    assert out[0].shape == (N, OUT)
    assert jnp.allclose(out[0], ref, atol=1e-5, rtol=1e-5)

    # with_avg_pool=False path: K-tiled fc over flattened C*H*W features.
    weight2 = 0.01 * jax.random.normal(kw2, (OUT, C * H * W), dtype=jnp.float32)
    out2 = linear_neck(x, weight2, bias, with_avg_pool=False)
    jax.block_until_ready(out2[0])
    ref2 = x.reshape(N, -1) @ weight2.T + bias
    assert out2[0].shape == (N, OUT)
    assert jnp.allclose(out2[0], ref2, atol=1e-5, rtol=1e-5)

    print("KERNEL_OK")
</pallas_src>

<mosaic_0001>
module attributes {stable_mosaic.version = 11 : i64} {
  func.func @_pooled_kernel(%arg0: i32, %arg1: i32, %arg2: memref<8x4x256xf32, #tpu.memory_space<vmem>>, %arg3: memref<4x32xf32, #tpu.memory_space<vmem>>, %arg4: memref<1x32xf32, #tpu.memory_space<vmem>>, %arg5: memref<8x32xf32, #tpu.memory_space<vmem>>, %arg6: memref<8x4xf32, #tpu.memory_space<vmem>>) attributes {dimension_semantics = [#tpu.dimension_semantics<parallel>, #tpu.dimension_semantics<arbitrary>], iteration_bounds = array<i64: 1, 1>, scalar_prefetch = 0 : i64, scratch_operands = 1 : i64, tpu.core_type = #tpu.core_type<tc>, window_params = [{transform_indices = @transform_0, window_bounds = array<i64: 8, 4, 256>}, {pipeline_mode = #tpu.pipeline_mode<synchronous>, transform_indices = @transform_1, window_bounds = array<i64: 4, 32>}, {pipeline_mode = #tpu.pipeline_mode<synchronous>, transform_indices = @transform_2, window_bounds = array<i64: 1, 32>}, {transform_indices = @transform_3, window_bounds = array<i64: 8, 32>}]} {
    %c0_i32 = arith.constant 0 : i32
    %0 = arith.cmpi eq, %arg1, %c0_i32 : i32
    %1 = arith.extui %0 : i1 to i32
    %c0_i32_0 = arith.constant 0 : i32
    %2 = arith.cmpi ne, %1, %c0_i32_0 : i32
    scf.if %2 {
      %cst_9 = arith.constant 0.000000e+00 : f32
      %11 = vector.broadcast %cst_9 : f32 to vector<8x4xf32>
      %c0_10 = arith.constant 0 : index
      %c0_11 = arith.constant 0 : index
      %12 = vector.load %arg6[%c0_10, %c0_11] : memref<8x4xf32, #tpu.memory_space<vmem>>, vector<8x4xf32>
      tpu.vector_store %arg6[%c0_10, %c0_11], %11 {strides = array<i32>} : memref<8x4xf32, #tpu.memory_space<vmem>>, vector<8x4xf32>,
    } else {
    }
    %c0 = arith.constant 0 : index
    %c0_1 = arith.constant 0 : index
    %c0_2 = arith.constant 0 : index
    %3 = vector.load %arg2[%c0, %c0_1, %c0_2] : memref<8x4x256xf32, #tpu.memory_space<vmem>>, vector<8x4x256xf32>
    %c0_3 = arith.constant 0 : index
    %c0_4 = arith.constant 0 : index
    %4 = vector.load %arg6[%c0_3, %c0_4] : memref<8x4xf32, #tpu.memory_space<vmem>>, vector<8x4xf32>
    %cst = arith.constant dense<0.000000e+00> : vector<8x4xf32>
    %5 = vector.multi_reduction <add>, %3, %cst [2] : vector<8x4x256xf32> to vector<8x4xf32>
    %6 = arith.addf %4, %5 : vector<8x4xf32>
    %c0_5 = arith.constant 0 : index
    %c0_6 = arith.constant 0 : index
    %7 = vector.load %arg6[%c0_5, %c0_6] : memref<8x4xf32, #tpu.memory_space<vmem>>, vector<8x4xf32>
    tpu.vector_store %arg6[%c0_5, %c0_6], %6 {strides = array<i32>} : memref<8x4xf32, #tpu.memory_space<vmem>>, vector<8x4xf32>,
    %c0_i32_7 = arith.constant 0 : i32
    %8 = arith.cmpi eq, %arg1, %c0_i32_7 : i32
    %9 = arith.extui %8 : i1 to i32
    %c0_i32_8 = arith.constant 0 : i32
    %10 = arith.cmpi ne, %9, %c0_i32_8 : i32
    scf.if %10 {
      %c0_9 = arith.constant 0 : index
      %c0_10 = arith.constant 0 : index
      %11 = vector.load %arg6[%c0_9, %c0_10] : memref<8x4xf32, #tpu.memory_space<vmem>>, vector<8x4xf32>
      %cst_11 = arith.constant 3.906250e-03 : f32
      %12 = vector.broadcast %cst_11 : f32 to vector<8x4xf32>
      %13 = arith.mulf %11, %12 : vector<8x4xf32>
      %c0_12 = arith.constant 0 : index
      %c0_13 = arith.constant 0 : index
      %14 = vector.load %arg3[%c0_12, %c0_13] : memref<4x32xf32, #tpu.memory_space<vmem>>, vector<4x32xf32>
      %cst_14 = arith.constant dense<0.000000e+00> : vector<8x32xf32>
      %15 = tpu.matmul %13, %14, %cst_14 {dimension_numbers = #tpu.dot_dimension_numbers<[1], [0], [0], [1], [0, 0, 1, 1], [], []>} : vector<8x4xf32>, vector<4x32xf32>, vector<8x32xf32> -> vector<8x32xf32>
      %c0_15 = arith.constant 0 : index
      %c0_16 = arith.constant 0 : index
      %16 = vector.load %arg4[%c0_15, %c0_16] : memref<1x32xf32, #tpu.memory_space<vmem>>, vector<1x32xf32>
      %17 = vector.broadcast %16 : vector<1x32xf32> to vector<8x32xf32>
      %18 = arith.addf %15, %17 : vector<8x32xf32>
      %c0_17 = arith.constant 0 : index
      %c0_18 = arith.constant 0 : index
      %19 = vector.load %arg5[%c0_17, %c0_18] : memref<8x32xf32, #tpu.memory_space<vmem>>, vector<8x32xf32>
      tpu.vector_store %arg5[%c0_17, %c0_18], %18 {strides = array<i32>} : memref<8x32xf32, #tpu.memory_space<vmem>>, vector<8x32xf32>,
    } else {
    }
    return
  }
  func.func @transform_0(%arg0: i32, %arg1: i32) -> (i32, i32, i32) {
    %c0_i32 = arith.constant 0 : i32
    %c0_i32_0 = arith.constant 0 : i32
    return %arg0, %c0_i32, %arg1 : i32, i32, i32
  }
  func.func @transform_1(%arg0: i32, %arg1: i32) -> (i32, i32) {
    %c0_i32 = arith.constant 0 : i32
    %c0_i32_0 = arith.constant 0 : i32
    %c0_i32_1 = arith.constant 0 : i32
    return %c0_i32, %c0_i32_0 : i32, i32
  }
  func.func @transform_2(%arg0: i32, %arg1: i32) -> (i32, i32) {
    %c0_i32 = arith.constant 0 : i32
    %c0_i32_0 = arith.constant 0 : i32
    %c0_i32_1 = arith.constant 0 : i32
    return %c0_i32, %c0_i32_0 : i32, i32
  }
  func.func @transform_3(%arg0: i32, %arg1: i32) -> (i32, i32) {
    %c0_i32 = arith.constant 0 : i32
    %c0_i32_0 = arith.constant 0 : i32
    return %arg0, %c0_i32 : i32, i32
  }
}

</mosaic_0001>

<llo_original>
// kernel: tpu_custom_call.1
$region0: #{tpu_custom_call.1}
  #allocation0 [shape = 'u32[]', space=smem, size = 0x4, offset = 0x4, fixed_abs, tag = 'smem constant byte address 0x4 - core index']
  #allocation1 [shape = 'u32[72,128]{1,0:T(1,128)}', space=vmem, size = 0x9000, scoped, tag = 'internal scratch']
  #allocation2 [shape = 'f32[8,4]{1,0:T(8,128)}', space=vmem, size = 0x1000, scoped, tag = 'scratch operand']
  %s0 = inlined_call_operand.hbm [shape: f32[8,4,256], index: 0, kind: input, shape index: {}]
  %s1 = inlined_call_operand.hbm [shape: f32[4,32], index: 1, kind: input, shape index: {}]
  %s2 = inlined_call_operand.vmem [shape: f32[1,32], index: 2, kind: input, shape index: {}]
  %s3 = inlined_call_operand.hbm [shape: f32[8,32], index: 3, kind: output, shape index: {}]
  %s4 = sld [smem:[#allocation0]]
  $region38: #{tpu_custom_call.1} parent=0
    _
  %s6 = ssub.s32 1, %s4
  %s7 = scalar_select 0, %s6, %s4
  $region1: #{tpu_custom_call.1} parent=0
    #allocation3 [shape = 'u8[32768]{0}', space=vmem, size = 0x8000, scoped, tag = 'input window, operand 0, single buffered']
    #allocation4 [shape = 's32[1]{0}', space=sflag, size = 0x4, scoped, tag = 'scoped memory for tpu_custom_call.1']
    #allocation5 [shape = 's32[1]{0}', space=sflag, size = 0x4, scoped, tag = 'scoped memory for tpu_custom_call.1']
    #allocation6 [shape = 'u8[2048]{0}', space=vmem, size = 0x800, scoped, tag = 'input window, operand 1, single buffered']
    #allocation7 [shape = 's32[1]{0}', space=sflag, size = 0x4, scoped, tag = 'scoped memory for tpu_custom_call.1']
    #allocation8 [shape = 'u8[4096]{0}', space=vmem, size = 0x1000, scoped, tag = 'output window, operand 0, single buffered']
    %8 = vsyncpa [#allocation4], 0
    %9 = vsyncpa [#allocation7], 0
    %10 = vsyncpa [#allocation5], 0
    // Predicated region
    $region2: #{tpu_custom_call.1} parent=1 // pred_check
      _
    $region3: #{tpu_custom_call.1} parent=1 // pred_check_branch
      %12 = sbr.rel (0) target = $region5
    $region4: #{tpu_custom_call.1} parent=1 // pred_region
      %14 = vsyncadd [#allocation4], 0
      %s15 = sshll.u32 %s0, 4
      %s16 = int_to_ptr.hbm [resolvable:$true] %s15
      %s17 = sshll.u32 [#allocation3], 4
      %s18 = int_to_ptr.vmem [resolvable:$true] %s17
      %23 = dma.hbm_to_vmem [thread:$0]  %s16, 1024, %s18, [#allocation4], 128, 128, 8
    $region5: #{tpu_custom_call.1} parent=1 // pred_fallthru
      _
    // Predicated region
    $region6: #{tpu_custom_call.1} parent=1 // pred_check
      _
    $region7: #{tpu_custom_call.1} parent=1 // pred_check_branch
      %25 = sbr.rel (0) target = $region9
    $region8: #{tpu_custom_call.1} parent=1 // pred_region
      %27 = vsyncadd [#allocation7], 0
      %s29 = sshll.u32 %s1, 4
      %s30 = int_to_ptr.hbm [resolvable:$true] %s29
      %s31 = sshll.u32 [#allocation6], 4
      %s32 = int_to_ptr.vmem [resolvable:$true] %s31
      %34 = dma.hbm_to_vmem [thread:$0]  %s30, 64, %s32, [#allocation7]
    $region9: #{tpu_custom_call.1} parent=1 // pred_fallthru
      _
    // Predicated region
    $region10: #{tpu_custom_call.1} parent=1 // pred_check
      _
    $region11: #{tpu_custom_call.1} parent=1 // pred_check_branch
      %36 = sbr.rel (0) target = $region13
    $region12: #{tpu_custom_call.1} parent=1 // pred_region
      _
    $region13: #{tpu_custom_call.1} parent=1 // pred_fallthru
      _
    // Predicated region
    $region14: #{tpu_custom_call.1} parent=1 // pred_check
      _
    $region15: #{tpu_custom_call.1} parent=1 // pred_check_branch
      %38 = sbr.rel (0) target = $region17
    $region16: #{tpu_custom_call.1} parent=1 // pred_region
      %40 = dma.done [#allocation4], 1024
    $region17: #{tpu_custom_call.1} parent=1 // pred_fallthru
      _
    // Predicated region
    $region18: #{tpu_custom_call.1} parent=1 // pred_check
      _
    $region19: #{tpu_custom_call.1} parent=1 // pred_check_branch
      %42 = sbr.rel (0) target = $region21
    $region20: #{tpu_custom_call.1} parent=1 // pred_region
      %44 = dma.done [#allocation7], 64
    $region21: #{tpu_custom_call.1} parent=1 // pred_fallthru
      _
    %p45 = scmp.eq.s32.totalorder 0, 0
    // Predicated region
    $region22: #{tpu_custom_call.1} parent=1 // pred_check
      %p46 = pneg %p45
    $region23: #{tpu_custom_call.1} parent=1 // pred_check_branch
      %48 = sbr.rel (%p46) target = $region25
    $region24: #{tpu_custom_call.1} parent=1 // pred_region
      %vm49 = vcmask 31744
      %50 = vst.msk [vmem:[#allocation2] sm:$0xff] %vm49, 0.0
    $region25: #{tpu_custom_call.1} parent=1 // pred_fallthru
      _
    %v51 = vld [vmem:[#allocation3] sm:$0xff]
    %v52 = vld [vmem:[#allocation3 + $0x8] sm:$0xff]
    %v53 = vld [vmem:[#allocation3 + $0x10] sm:$0xff]
    %v54 = vld [vmem:[#allocation3 + $0x18] sm:$0xff]
    %v55 = vld [vmem:[#allocation3 + $0x20] sm:$0xff]
    %v56 = vld [vmem:[#allocation3 + $0x28] sm:$0xff]
    %v57 = vld [vmem:[#allocation3 + $0x30] sm:$0xff]
    %v58 = vld [vmem:[#allocation3 + $0x38] sm:$0xff]
    %v59 = vld [vmem:[#allocation2] sm:$0xff]
    %68 = vst [vmem:[#allocation1] ss:$2 sm:$0xff] %v51
    %v69 = vld.sshfl [vmem:[#allocation1] sm:$0xff pattern:$0x75316420]
    %v70 = vld.sshfl [vmem:[#allocation1 + $0x8] sm:$0xff pattern:$0x75316420]
    %s71 = scalar_lea.vmem [#allocation1], 16
    %72 = vst [vmem:[%s71] ss:$2 sm:$0xff] %v52
    %v73 = vld.sshfl [vmem:[#allocation1 + $0x10] sm:$0xff pattern:$0x75316420]
    %v74 = vld.sshfl [vmem:[#allocation1 + $0x18] sm:$0xff pattern:$0x75316420]
    %s75 = scalar_lea.vmem [#allocation1], 32
    %76 = vst [vmem:[%s75] ss:$2 sm:$0xff] %v53
    %v77 = vld.sshfl [vmem:[#allocation1 + $0x20] sm:$0xff pattern:$0x75316420]
    %v78 = vld.sshfl [vmem:[#allocation1 + $0x28] sm:$0xff pattern:$0x75316420]
    %s79 = scalar_lea.vmem [#allocation1], 48
    %80 = vst [vmem:[%s79] ss:$2 sm:$0xff] %v54
    %v81 = vld.sshfl [vmem:[#allocation1 + $0x30] sm:$0xff pattern:$0x75316420]
    %v82 = vld.sshfl [vmem:[#allocation1 + $0x38] sm:$0xff pattern:$0x75316420]
    %83 = vst [vmem:[#allocation1] ss:$2 sm:$0xff] %v55
    %v84 = vld.sshfl [vmem:[#allocation1] sm:$0xff pattern:$0x75316420]
    %v85 = vld.sshfl [vmem:[#allocation1 + $0x8] sm:$0xff pattern:$0x75316420]
    %86 = vst [vmem:[%s71] ss:$2 sm:$0xff] %v56
    %v87 = vld.sshfl [vmem:[#allocation1 + $0x10] sm:$0xff pattern:$0x75316420]
    %v88 = vld.sshfl [vmem:[#allocation1 + $0x18] sm:$0xff pattern:$0x75316420]
    %89 = vst [vmem:[%s75] ss:$2 sm:$0xff] %v57
    %v90 = vld.sshfl [vmem:[#allocation1 + $0x20] sm:$0xff pattern:$0x75316420]
    %v91 = vld.sshfl [vmem:[#allocation1 + $0x28] sm:$0xff pattern:$0x75316420]
    %92 = vst [vmem:[%s79] ss:$2 sm:$0xff] %v58
    %v93 = vld.sshfl [vmem:[#allocation1 + $0x30] sm:$0xff pattern:$0x75316420]
    %v94 = vld.sshfl [vmem:[#allocation1 + $0x38] sm:$0xff pattern:$0x75316420]
    %vm111 = vcmask 1043456
    %v112 = vsel %vm111, %v69, 0.0
    %v113 = vsel %vm111, %v70, 0.0
    %v114 = vadd.f32 %v112, %v113
    %115 = vadd.xlane.f32.xlu0 %v114
    %v116 = vpop.xlane.xlu0 %115
    %v117 = vsel %vm111, %v73, 0.0
    %v118 = vsel %vm111, %v74, 0.0
    %v119 = vadd.f32 %v117, %v118
    %120 = vadd.xlane.f32.xlu0 %v119
    %v121 = vpop.xlane.xlu0 %120
    %v122 = vsel %vm111, %v77, 0.0
    %v123 = vsel %vm111, %v78, 0.0
    %v124 = vadd.f32 %v122, %v123
    %125 = vadd.xlane.f32.xlu0 %v124
    %v126 = vpop.xlane.xlu0 %125
    %v127 = vsel %vm111, %v81, 0.0
    %v128 = vsel %vm111, %v82, 0.0
    %v129 = vadd.f32 %v127, %v128
    %130 = vadd.xlane.f32.xlu0 %v129
    %v131 = vpop.xlane.xlu0 %130
    %v132 = vsel %vm111, %v84, 0.0
    %v133 = vsel %vm111, %v85, 0.0
    %v134 = vadd.f32 %v132, %v133
    %135 = vadd.xlane.f32.xlu0 %v134
    %v136 = vpop.xlane.xlu0 %135
    %v137 = vsel %vm111, %v87, 0.0
    %v138 = vsel %vm111, %v88, 0.0
    %v139 = vadd.f32 %v137, %v138
    %140 = vadd.xlane.f32.xlu0 %v139
    %v141 = vpop.xlane.xlu0 %140
    %v142 = vsel %vm111, %v90, 0.0
    %v143 = vsel %vm111, %v91, 0.0
    %v144 = vadd.f32 %v142, %v143
    %145 = vadd.xlane.f32.xlu0 %v144
    %v146 = vpop.xlane.xlu0 %145
    %v147 = vsel %vm111, %v93, 0.0
    %v148 = vsel %vm111, %v94, 0.0
    %v149 = vadd.f32 %v147, %v148
    %150 = vadd.xlane.f32.xlu0 %v149
    %v151 = vpop.xlane.xlu0 %150
    %v160 = vlaneseq
    %v161 = vand.u32 %v160, 127
    %v162 = vperm.slane %v116, %v161
    %v163 = vperm.slane %v121, %v161
    %v164 = vperm.slane %v126, %v161
    %v165 = vperm.slane %v131, %v161
    %v166 = vperm.slane %v136, %v161
    %v167 = vperm.slane %v141, %v161
    %v168 = vperm.slane %v146, %v161
    %v169 = vperm.slane %v151, %v161
    %vm170 = vcmask 1041409
    %v171 = vsel %vm170, %v163, %v162
    %vm172 = vcmask 1042434
    %v173 = vsel %vm172, %v164, %v171
    %vm174 = vcmask 1043459
    %v175 = vsel %vm174, %v165, %v173
    %vm176 = vcmask 1044484
    %v177 = vsel %vm176, %v166, %v175
    %vm178 = vcmask 1045509
    %v179 = vsel %vm178, %v167, %v177
    %vm180 = vcmask 1046534
    %v181 = vsel %vm180, %v168, %v179
    %vm182 = vcmask 1047559
    %v183 = vsel %vm182, %v169, %v181
    %v185 = vadd.f32 %v59, %v183
    %vm186 = vcmask 31744
    %187 = vst.msk [vmem:[#allocation2] sm:$0xff] %vm186, %v185
    // Predicated region
    $region26: #{tpu_custom_call.1} parent=1 // pred_check
      %p188 = pneg %p45
    $region27: #{tpu_custom_call.1} parent=1 // pred_check_branch
      %190 = sbr.rel (%p188) target = $region29
    $region28: #{tpu_custom_call.1} parent=1 // pred_region
      %v191 = vld [vmem:[#allocation2] sm:$0xff]
      %v192 = vmul.f32 %v191, 0.00390625
      %v193 = vld [vmem:[#allocation6] sm:$0xf]
      %v194 = vld [vmem:[%s2] sm:$0x1]
      %v196 = vperm.slane %v194, 0
      %v199 = vsel %vm186, %v192, 0
      %v202 = vsel %vm111, %v193, 0
      %204 = vmatpush.msra.mxu0 0.0
      %205 = vmatpush.msra.mxu0 0.0
      %206 = vmatpush.msra.mxu0 0.0
      %207 = vmatpush.msra.mxu0 0.0
      %208 = vmatpush.msra.mxu0 0.0
      %209 = vmatpush.msra.mxu0 0.0
      %210 = vmatpush.msra.mxu0 0.0
      %211 = vmatpush.msra.mxu0 0.0
      %212 = vmatpush.msra.mxu0 0.0
      %213 = vmatpush.msra.mxu0 0.0
      %214 = vmatpush.msra.mxu0 0.0
      %215 = vmatpush.msra.mxu0 0.0
      %216 = vmatpush.msra.mxu0 0.0
      %217 = vmatpush.msra.mxu0 0.0
      %218 = vmatpush.msra.mxu0 0.0
      %219 = vmatpush.msra.mxu0 %v202
      %220 = vmatmul.f32.gmra.mxu0 %v199
      %v221 = vpop.f32.mrf.mxu0
      %v222 = vadd.f32 %v196, %v221
      %223 = vdwg.mxu0
      %vm224 = vcmask 261120
      %225 = vst.msk [vmem:[#allocation8] sm:$0xff] %vm224, %v222
    $region29: #{tpu_custom_call.1} parent=1 // pred_fallthru
      _
    // Predicated region
    $region30: #{tpu_custom_call.1} parent=1 // pred_check
      _
    $region31: #{tpu_custom_call.1} parent=1 // pred_check_branch
      %227 = sbr.rel (0) target = $region33
    $region32: #{tpu_custom_call.1} parent=1 // pred_region
      %229 = vsyncadd [#allocation5], 0
      %s231 = sshll.u32 [#allocation8], 4
      %s232 = int_to_ptr.vmem [resolvable:$true] %s231
      %s233 = sshll.u32 %s3, 4
      %s234 = int_to_ptr.hbm [resolvable:$true] %s233
      %236 = dma.vmem_to_hbm [thread:$0]  %s232, 128, %s234, [#allocation5]
    $region33: #{tpu_custom_call.1} parent=1 // pred_fallthru
      _
    // Predicated region
    $region34: #{tpu_custom_call.1} parent=1 // pred_check
      _
    $region35: #{tpu_custom_call.1} parent=1 // pred_check_branch
      %238 = sbr.rel (0) target = $region37
    $region36: #{tpu_custom_call.1} parent=1 // pred_region
      %240 = dma.done [#allocation5], 128
    $region37: #{tpu_custom_call.1} parent=1 // pred_fallthru
      _
    %241 = vsyncpa [#allocation4], 1
    %242 = vsyncpa [#allocation7], 1
    %243 = vsyncpa [#allocation5], 1

</llo_original>
